<compile_context>
chip_gen: v7x
topology: tpu7x:2x2x1
jax: 0.10.0
libtpu: 0.0.40
codegen_flags: <defaults>
</compile_context>

<pallas_src>
import functools

import jax
import jax.numpy as jnp
from jax import lax
from jax.experimental import pallas as pl
from jax.experimental.pallas import tpu as pltpu

EPS = 1e-12  # F.normalize default eps (clamp on the norm)


def _round_up(a: int, b: int) -> int:
    return ((a + b - 1) // b) * b


def _vmem_capacity_bytes() -> int:
    try:
        return int(pltpu.get_tpu_info().vmem_capacity_bytes)
    except Exception:
        return 64 * 1024 * 1024  # conservative fallback (v7x per-core VMEM)


def _sublane_align(dtype) -> int:
    return {4: 8, 2: 16, 1: 32}.get(jnp.dtype(dtype).itemsize, 8)


def _inv_norm_kernel(a_ref, o_ref, *, axis, k_size, tk, scale):
    """Accumulate sum-of-squares along `axis` over the K grid axis (axis 1),
    then finalize to scale * rsqrt(max(sumsq, eps^2))  ==  scale / max(norm, eps)."""
    kk = pl.program_id(1)

    @pl.when(kk == 0)
    def _():
        o_ref[...] = jnp.zeros_like(o_ref)

    a = a_ref[...].astype(jnp.float32)
    if k_size % tk:  # static: only emit the mask when a padded K tail exists
        ids = lax.broadcasted_iota(jnp.int32, a.shape, axis)
        a = jnp.where(kk * tk + ids < k_size, a, 0.0)
    o_ref[...] += jnp.sum(a * a, axis=axis, keepdims=True)

    @pl.when(kk == pl.num_programs(1) - 1)
    def _():
        o_ref[...] = scale * lax.rsqrt(jnp.maximum(o_ref[...], EPS * EPS))


def _scaled_matmul_kernel(x_ref, w_ref, rs_ref, cs_ref, o_ref, acc_ref,
                          *, k_size, tk, mxu_dtype):
    """Raw-operand tm x tn x tk matmul with f32 accumulator; deferred
    row/col normalization + temperature applied as an output-tile scale."""
    kk = pl.program_id(2)

    @pl.when(kk == 0)
    def _():
        acc_ref[...] = jnp.zeros_like(acc_ref)

    x_blk = x_ref[...]
    w_blk = w_ref[...]
    if k_size % tk:  # static: zero-mask the padded K tail (select, not multiply)
        xm = lax.broadcasted_iota(jnp.int32, x_blk.shape, 1)
        x_blk = jnp.where(kk * tk + xm < k_size, x_blk, jnp.zeros_like(x_blk))
        wm = lax.broadcasted_iota(jnp.int32, w_blk.shape, 0)
        w_blk = jnp.where(kk * tk + wm < k_size, w_blk, jnp.zeros_like(w_blk))
    if mxu_dtype is not None:
        x_blk = x_blk.astype(mxu_dtype)
        w_blk = w_blk.astype(mxu_dtype)

    acc_ref[...] += jnp.dot(x_blk, w_blk, preferred_element_type=jnp.float32)

    @pl.when(kk == pl.num_programs(2) - 1)
    def _():
        # (1/||x_i||) * acc * (temperature/||w_j||), all in f32, then cast once.
        o_ref[...] = (acc_ref[...] * rs_ref[...] * cs_ref[...]).astype(o_ref.dtype)


def vanilla_stellar_normed_linear(x, weight, temperature, *,
                                  tm=None, tn=None, tk=None, mxu_dtype=None):
    """Pallas implementation of VanillaStellarNormedLinear.forward."""
    n, k = x.shape
    k_w, n_out = weight.shape
    assert k == k_w

    cap = _vmem_capacity_bytes()
    vmem_limit = int(cap * 0.80)
    budget = vmem_limit - (4 << 20)

    big_vmem = cap >= 96 * 1024 * 1024          # v5e / v6e (128 MiB) vs v7x (64 MiB)
    tm_d, tn_d, tk_d = (1024, 256, 1024) if big_vmem else (512, 256, 512)

    sub = _sublane_align(x.dtype)
    tm = min(tm or tm_d, _round_up(n, sub))
    tn = min(tn or tn_d, _round_up(n_out, 128))
    tk_base = tk or tk_d
    tk = k if k <= tk_base else tk_base          # full-K block when K is small

    xb = jnp.dtype(x.dtype).itemsize
    wb = jnp.dtype(weight.dtype).itemsize
    ob = jnp.dtype(x.dtype).itemsize

    def _footprint():
        return (2 * tm * tk * xb + 2 * tk * tn * wb + 2 * tm * tn * ob
                + tm * tn * 4 + 2 * tm * 4 + 2 * tn * 4)

    # Shrink (tk first, then tm, then tn) if the double-buffered blocks + acc
    # would exceed the per-generation VMEM budget.
    while _footprint() > budget:
        if tk >= 512 and tk % 256 == 0:
            tk //= 2
        elif tm >= 512 and tm % 256 == 0:
            tm //= 2
        elif tn >= 512 and tn % 256 == 0:
            tn //= 2
        else:
            break

    # ---- Pre-pass A: per-column scales  temperature / ||W[:, j]||  (1, out) ----
    tkn = k if k <= 512 else 512                 # K-chunked sumsq (large-K safe)
    tnc = min(512, _round_up(n_out, 128))
    col_scale = pl.pallas_call(
        functools.partial(_inv_norm_kernel, axis=0, k_size=k, tk=tkn,
                          scale=float(temperature)),
        out_shape=jax.ShapeDtypeStruct((1, n_out), jnp.float32),
        grid_spec=pltpu.PrefetchScalarGridSpec(
            num_scalar_prefetch=0,
            grid=(pl.cdiv(n_out, tnc), pl.cdiv(k, tkn)),
            in_specs=[pl.BlockSpec((tkn, tnc), lambda j, kk: (kk, j))],
            out_specs=pl.BlockSpec((1, tnc), lambda j, kk: (0, j)),
        ),
        compiler_params=pltpu.CompilerParams(
            dimension_semantics=("parallel", "arbitrary"),
            vmem_limit_bytes=vmem_limit),
    )(weight)

    # ---- Pre-pass B: per-row scales  1 / ||x[i, :]||  (N, 1) ----
    tmr = min(512, _round_up(n, 8))
    row_scale = pl.pallas_call(
        functools.partial(_inv_norm_kernel, axis=1, k_size=k, tk=tkn, scale=1.0),
        out_shape=jax.ShapeDtypeStruct((n, 1), jnp.float32),
        grid_spec=pltpu.PrefetchScalarGridSpec(
            num_scalar_prefetch=0,
            grid=(pl.cdiv(n, tmr), pl.cdiv(k, tkn)),
            in_specs=[pl.BlockSpec((tmr, tkn), lambda i, kk: (i, kk))],
            out_specs=pl.BlockSpec((tmr, 1), lambda i, kk: (i, 0)),
        ),
        compiler_params=pltpu.CompilerParams(
            dimension_semantics=("parallel", "arbitrary"),
            vmem_limit_bytes=vmem_limit),
    )(x)

    # ---- Hot path: raw-operand tiled matmul with deferred output scaling ----
    return pl.pallas_call(
        functools.partial(_scaled_matmul_kernel, k_size=k, tk=tk,
                          mxu_dtype=mxu_dtype),
        out_shape=jax.ShapeDtypeStruct((n, n_out), x.dtype),
        grid_spec=pltpu.PrefetchScalarGridSpec(
            num_scalar_prefetch=0,
            grid=(pl.cdiv(n, tm), pl.cdiv(n_out, tn), pl.cdiv(k, tk)),
            in_specs=[
                pl.BlockSpec((tm, tk), lambda i, j, kk: (i, kk)),  # raw x tile
                pl.BlockSpec((tk, tn), lambda i, j, kk: (kk, j)),  # raw W tile
                pl.BlockSpec((tm, 1), lambda i, j, kk: (i, 0)),    # row inv norms
                pl.BlockSpec((1, tn), lambda i, j, kk: (0, j)),    # temp*col inv norms
            ],
            out_specs=pl.BlockSpec((tm, tn), lambda i, j, kk: (i, j)),
            scratch_shapes=[pltpu.VMEM((tm, tn), jnp.float32)],
        ),
        compiler_params=pltpu.CompilerParams(
            dimension_semantics=("parallel", "parallel", "arbitrary"),
            vmem_limit_bytes=vmem_limit),
    )(x, weight, row_scale, col_scale)


def init_weight(key, in_features, out_features):
    """Deterministic replica of:
       weight.data.uniform_(-1, 1).renorm_(2, 1, 1e-05).mul_(100000.0)
    i.e. each COLUMN is renormed to L2-norm <= 1e-5, then scaled by 1e5."""
    w = jax.random.uniform(key, (in_features, out_features),
                           minval=-1.0, maxval=1.0, dtype=jnp.float32)
    col_norm = jnp.sqrt(jnp.sum(w * w, axis=0, keepdims=True))
    maxnorm = 1e-5
    scale = jnp.where(col_norm > maxnorm, maxnorm / (col_norm + 1e-7), 1.0)
    return w * scale * 1e5


def reference(x, weight, temperature):
    xn = x / jnp.maximum(jnp.linalg.norm(x, axis=1, keepdims=True), EPS)
    wn = weight / jnp.maximum(jnp.linalg.norm(weight, axis=0, keepdims=True), EPS)
    return temperature * (xn @ wn)


if __name__ == "__main__":
    key = jax.random.PRNGKey(0)
    k1, k2, k3, k4 = jax.random.split(key, 4)
    TEMPERATURE = 10.0

    # Case 1: small aligned shapes (typical classification head).
    x1 = jax.random.normal(k1, (16, 32), dtype=jnp.float32)
    w1 = init_weight(k2, 32, 128)
    out1 = jax.block_until_ready(vanilla_stellar_normed_linear(x1, w1, TEMPERATURE))
    ref1 = reference(x1, w1, TEMPERATURE)
    assert out1.shape == (16, 128)
    assert jnp.allclose(out1, ref1, atol=2e-3, rtol=2e-3), "case 1 mismatch"

    # Case 2: force the K grid axis + padded-K-tail masking + ragged N/out tails.
    x2 = jax.random.normal(k3, (24, 640), dtype=jnp.float32)
    w2 = init_weight(k4, 640, 72)
    out2 = jax.block_until_ready(
        vanilla_stellar_normed_linear(x2, w2, TEMPERATURE, tk=256))
    ref2 = reference(x2, w2, TEMPERATURE)
    assert out2.shape == (24, 72)
    assert jnp.allclose(out2, ref2, atol=2e-3, rtol=2e-3), "case 2 mismatch"

    print("KERNEL_OK")
</pallas_src>

<mosaic_0001>
module attributes {stable_mosaic.version = 11 : i64} {
  func.func @_inv_norm_kernel(%arg0: i32, %arg1: i32, %arg2: memref<32x128xf32, #tpu.memory_space<vmem>>, %arg3: memref<1x128xf32, #tpu.memory_space<vmem>>) attributes {dimension_semantics = [#tpu.dimension_semantics<parallel>, #tpu.dimension_semantics<arbitrary>], iteration_bounds = array<i64: 1, 1>, scalar_prefetch = 0 : i64, scratch_operands = 0 : i64, tpu.core_type = #tpu.core_type<tc>, window_params = [{transform_indices = @transform_0, window_bounds = array<i64: 32, 128>}, {transform_indices = @transform_1, window_bounds = array<i64: 1, 128>}]} {
    %c0_i32 = arith.constant 0 : i32
    %0 = arith.cmpi eq, %arg1, %c0_i32 : i32
    %1 = arith.extui %0 : i1 to i32
    %c0_i32_0 = arith.constant 0 : i32
    %2 = arith.cmpi ne, %1, %c0_i32_0 : i32
    scf.if %2 {
      %cst_8 = arith.constant 0.000000e+00 : f32
      %13 = vector.broadcast %cst_8 : f32 to vector<1x128xf32>
      %c0_9 = arith.constant 0 : index
      %c0_10 = arith.constant 0 : index
      %14 = vector.load %arg3[%c0_9, %c0_10] : memref<1x128xf32, #tpu.memory_space<vmem>>, vector<1x128xf32>
      tpu.vector_store %arg3[%c0_9, %c0_10], %13 {strides = array<i32>} : memref<1x128xf32, #tpu.memory_space<vmem>>, vector<1x128xf32>,
    } else {
    }
    %c0 = arith.constant 0 : index
    %c0_1 = arith.constant 0 : index
    %3 = vector.load %arg2[%c0, %c0_1] : memref<32x128xf32, #tpu.memory_space<vmem>>, vector<32x128xf32>
    %c0_2 = arith.constant 0 : index
    %c0_3 = arith.constant 0 : index
    %4 = vector.load %arg3[%c0_2, %c0_3] : memref<1x128xf32, #tpu.memory_space<vmem>>, vector<1x128xf32>
    %5 = arith.mulf %3, %3 : vector<32x128xf32>
    %cst = arith.constant dense<0.000000e+00> : vector<128xf32>
    %6 = vector.multi_reduction <add>, %5, %cst [0] : vector<32x128xf32> to vector<128xf32>
    %7 = vector.shape_cast %6 : vector<128xf32> to vector<1x128xf32>
    %8 = arith.addf %4, %7 : vector<1x128xf32>
    %c0_4 = arith.constant 0 : index
    %c0_5 = arith.constant 0 : index
    %9 = vector.load %arg3[%c0_4, %c0_5] : memref<1x128xf32, #tpu.memory_space<vmem>>, vector<1x128xf32>
    tpu.vector_store %arg3[%c0_4, %c0_5], %8 {strides = array<i32>} : memref<1x128xf32, #tpu.memory_space<vmem>>, vector<1x128xf32>,
    %c0_i32_6 = arith.constant 0 : i32
    %10 = arith.cmpi eq, %arg1, %c0_i32_6 : i32
    %11 = arith.extui %10 : i1 to i32
    %c0_i32_7 = arith.constant 0 : i32
    %12 = arith.cmpi ne, %11, %c0_i32_7 : i32
    scf.if %12 {
      %c0_8 = arith.constant 0 : index
      %c0_9 = arith.constant 0 : index
      %13 = vector.load %arg3[%c0_8, %c0_9] : memref<1x128xf32, #tpu.memory_space<vmem>>, vector<1x128xf32>
      %cst_10 = arith.constant 1.000000e-24 : f32
      %14 = vector.broadcast %cst_10 : f32 to vector<1x128xf32>
      %15 = arith.maximumf %13, %14 : vector<1x128xf32>
      %16 = math.rsqrt %15 : vector<1x128xf32>
      %cst_11 = arith.constant 1.000000e+01 : f32
      %17 = vector.broadcast %cst_11 : f32 to vector<1x128xf32>
      %18 = arith.mulf %17, %16 : vector<1x128xf32>
      %c0_12 = arith.constant 0 : index
      %c0_13 = arith.constant 0 : index
      %19 = vector.load %arg3[%c0_12, %c0_13] : memref<1x128xf32, #tpu.memory_space<vmem>>, vector<1x128xf32>
      tpu.vector_store %arg3[%c0_12, %c0_13], %18 {strides = array<i32>} : memref<1x128xf32, #tpu.memory_space<vmem>>, vector<1x128xf32>,
    } else {
    }
    return
  }
  func.func @transform_0(%arg0: i32, %arg1: i32) -> (i32, i32) {
    %c0_i32 = arith.constant 0 : i32
    return %arg1, %arg0 : i32, i32
  }
  func.func @transform_1(%arg0: i32, %arg1: i32) -> (i32, i32) {
    %c0_i32 = arith.constant 0 : i32
    %c0_i32_0 = arith.constant 0 : i32
    return %c0_i32, %arg0 : i32, i32
  }
}

</mosaic_0001>

<llo_original>
// kernel: tpu_custom_call.1
$region0: #{tpu_custom_call.1}
  #allocation0 [shape = 'u32[]', space=smem, size = 0x4, offset = 0x4, fixed_abs, tag = 'smem constant byte address 0x4 - core index']
  #allocation1 [shape = 'u32[144,128]{1,0:T(1,128)}', space=vmem, size = 0x12000, scoped, tag = 'internal scratch']
  %s0 = inlined_call_operand.hbm [shape: f32[32,128], index: 0, kind: input, shape index: {}]
  %s1 = inlined_call_operand.hbm [shape: f32[1,128], index: 1, kind: output, shape index: {}]
  %s2 = sld [smem:[#allocation0]]
  $region26: #{tpu_custom_call.1} parent=0
    _
  %s4 = ssub.s32 1, %s2
  %s5 = scalar_select 0, %s4, %s2
  $region1: #{tpu_custom_call.1} parent=0
    #allocation2 [shape = 'u8[16384]{0}', space=vmem, size = 0x4000, scoped, tag = 'input window, operand 0, single buffered']
    #allocation3 [shape = 's32[1]{0}', space=sflag, size = 0x4, scoped, tag = 'scoped memory for tpu_custom_call.1']
    #allocation4 [shape = 's32[1]{0}', space=sflag, size = 0x4, scoped, tag = 'scoped memory for tpu_custom_call.1']
    #allocation5 [shape = 'u8[512]{0}', space=vmem, size = 0x400, scoped, tag = 'output window, operand 0, single buffered']
    %6 = vsyncpa [#allocation3], 0
    %7 = vsyncpa [#allocation4], 0
    // Predicated region
    $region2: #{tpu_custom_call.1} parent=1 // pred_check
      _
    $region3: #{tpu_custom_call.1} parent=1 // pred_check_branch
      %9 = sbr.rel (0) target = $region5
    $region4: #{tpu_custom_call.1} parent=1 // pred_region
      %s11 = ssub.s32 512, 512
      %12 = vsyncadd [#allocation3], %s11
      %s13 = sshll.u32 [#allocation2], 4
      %s14 = int_to_ptr.vmem [resolvable:$true] %s13
      %19 = dma.hbm_to_vmem [thread:$0]  %s0, 512, %s14, [#allocation3], 128, 128, 8
    $region5: #{tpu_custom_call.1} parent=1 // pred_fallthru
      _
    // Predicated region
    $region6: #{tpu_custom_call.1} parent=1 // pred_check
      _
    $region7: #{tpu_custom_call.1} parent=1 // pred_check_branch
      %21 = sbr.rel (0) target = $region9
    $region8: #{tpu_custom_call.1} parent=1 // pred_region
      %22 = dma.done [#allocation3], 512
    $region9: #{tpu_custom_call.1} parent=1 // pred_fallthru
      _
    %p23 = scmp.eq.s32.totalorder 0, 0
    // Predicated region
    $region10: #{tpu_custom_call.1} parent=1 // pred_check
      %p24 = pneg %p23
    $region11: #{tpu_custom_call.1} parent=1 // pred_check_branch
      %26 = sbr.rel (%p24) target = $region13
    $region12: #{tpu_custom_call.1} parent=1 // pred_region
      %27 = vst [vmem:[#allocation5] sm:$0x1] 0.0
    $region13: #{tpu_custom_call.1} parent=1 // pred_fallthru
      _
    %v28 = vld [vmem:[#allocation2] sm:$0xff]
    %v29 = vld [vmem:[#allocation2 + $0x8] sm:$0xff]
    %v30 = vld [vmem:[#allocation2 + $0x10] sm:$0xff]
    %v31 = vld [vmem:[#allocation2 + $0x18] sm:$0xff]
    %v32 = vld [vmem:[#allocation5] sm:$0x1]
    %v33 = vmul.f32 %v28, %v28
    %v34 = vmul.f32 %v29, %v29
    %v35 = vmul.f32 %v30, %v30
    %v36 = vmul.f32 %v31, %v31
    %v37 = vadd.f32 %v33, %v34
    %v38 = vadd.f32 %v37, %v35
    %v39 = vadd.f32 %v38, %v36
    %v40 = vrot.slane %v39, 4
    %v41 = vadd.f32 %v39, %v40
    %v42 = vrot.slane %v41, 2
    %v43 = vadd.f32 %v41, %v42
    %v44 = vrot.slane %v43, 1
    %v45 = vadd.f32 %v43, %v44
    %v46 = vadd.f32 %v32, %v45
    %47 = vst [vmem:[#allocation5] sm:$0x1] %v46
    // Predicated region
    $region14: #{tpu_custom_call.1} parent=1 // pred_check
      %p48 = pneg %p23
    $region15: #{tpu_custom_call.1} parent=1 // pred_check_branch
      %50 = sbr.rel (%p48) target = $region17
    $region16: #{tpu_custom_call.1} parent=1 // pred_region
      %v51 = vld [vmem:[#allocation5] sm:$0x1]
      %v52 = vmax.f32 %v51, 1e-24
      %v53 = vrsqrt.pop %v52
      %v54 = vmul.f32 %v53, 10.0
      %55 = vst [vmem:[#allocation5] sm:$0x1] %v54
    $region17: #{tpu_custom_call.1} parent=1 // pred_fallthru
      _
    // Predicated region
    $region18: #{tpu_custom_call.1} parent=1 // pred_check
      _
    $region19: #{tpu_custom_call.1} parent=1 // pred_check_branch
      %57 = sbr.rel (0) target = $region21
    $region20: #{tpu_custom_call.1} parent=1 // pred_region
      %s59 = ssub.s32 16, 16
      %60 = vsyncadd [#allocation4], %s59
      %s62 = sshll.u32 [#allocation5], 4
      %s63 = int_to_ptr.vmem [resolvable:$true] %s62
      %65 = dma.vmem_to_hbm [thread:$0]  %s63, 16, %s1, [#allocation4]
    $region21: #{tpu_custom_call.1} parent=1 // pred_fallthru
      _
    // Predicated region
    $region22: #{tpu_custom_call.1} parent=1 // pred_check
      _
    $region23: #{tpu_custom_call.1} parent=1 // pred_check_branch
      %67 = sbr.rel (0) target = $region25
    $region24: #{tpu_custom_call.1} parent=1 // pred_region
      %68 = dma.done [#allocation4], 16
    $region25: #{tpu_custom_call.1} parent=1 // pred_fallthru
      _
    %69 = vsyncpa [#allocation3], 1
    %70 = vsyncpa [#allocation4], 1

</llo_original>
